<compile_context>
chip_gen: v6e
topology: v6e:2x2x1
jax: 0.10.0
libtpu: 0.0.40
codegen_flags: <defaults>
</compile_context>

<pallas_src>
from functools import partial

import jax
import jax.numpy as jnp
from jax.experimental import pallas as pl
from jax.experimental.pallas import tpu as pltpu

_LANE = 128
_MAX_LANE_WIDTH = 8192               # lane-dense output (biggest measured lever)
_MAX_BLOCK_BYTES = 2 * 1024 * 1024   # 2 MiB/tile -> <= 8 MiB double-buffered VMEM


def _copy_kernel(x_ref, o_ref):
    # Identity pass-through of one lane-dense VMEM tile.
    o_ref[...] = x_ref[...]


def _resolve_shape(total, shape):
    """Resolve a single -1 dimension exactly like torch.Tensor.view."""
    shape = list(shape)
    neg = [i for i, s in enumerate(shape) if s == -1]
    if len(neg) > 1:
        raise ValueError("only one dimension can be inferred")
    if neg:
        known = 1
        for i, s in enumerate(shape):
            if i != neg[0]:
                known *= s
        if known == 0 or total % known != 0:
            raise ValueError(f"shape {shape} is invalid for input of size {total}")
        shape[neg[0]] = total // known
    else:
        prod = 1
        for s in shape:
            prod *= s
        if prod != total:
            raise ValueError(f"shape {shape} is invalid for input of size {total}")
    return tuple(shape)


def _sublane_pack(itemsize):
    # bf16 packs rows in pairs, int8/fp8 in quads: keep stores unmasked.
    return max(8, 8 * (4 // max(1, itemsize)))


def _plan_slab(total, itemsize):
    """Pick (rows, lane_width, block_rows) for a lane-dense tiled copy.

    Returns None when the buffer cannot be tiled without padding; the caller
    then uses a metadata-only reshape (zero extra HBM traffic).
    """
    if total == 0 or total % _LANE != 0:
        return None

    # Widest lane dimension (multiple of 128, capped) that divides the buffer.
    upper = min(_MAX_LANE_WIDTH, total)
    upper -= upper % _LANE
    w = _LANE
    for cand in range(upper, _LANE - 1, -_LANE):
        if total % cand == 0:
            w = cand
            break
    rows = total // w

    pack = _sublane_pack(itemsize)
    if rows % pack != 0:
        # A single block equal to the full array dims is always legal.
        if rows * w * itemsize <= _MAX_BLOCK_BYTES:
            return rows, w, rows
        return None

    max_rows = max(pack, _MAX_BLOCK_BYTES // (w * itemsize))
    max_rows -= max_rows % pack
    block_rows = pack
    r = min(max_rows, rows)
    while r >= pack:
        if rows % r == 0:
            block_rows = r
            break
        r -= pack
    return rows, w, block_rows


@partial(jax.jit, static_argnums=(1,))
def _reshape_impl(x, out_shape):
    total = x.size
    itemsize = jnp.dtype(x.dtype).itemsize
    plan = _plan_slab(total, itemsize)

    if plan is None:
        # Metadata-only path: identical semantics to torch .view on a
        # contiguous tensor, no pad/slice copies introduced.
        return jnp.reshape(x, out_shape)

    rows, w, block_rows = plan
    slab = jnp.reshape(x, (rows, w))  # metadata-only inside the jit

    out_slab = pl.pallas_call(
        _copy_kernel,
        out_shape=jax.ShapeDtypeStruct((rows, w), x.dtype),
        grid_spec=pltpu.PrefetchScalarGridSpec(
            num_scalar_prefetch=0,
            grid=(rows // block_rows,),
            in_specs=[pl.BlockSpec((block_rows, w), lambda i: (i, 0))],
            out_specs=pl.BlockSpec((block_rows, w), lambda i: (i, 0)),
        ),
        # In-place when the input buffer is donatable: no second HBM buffer.
        input_output_aliases={0: 0},
        compiler_params=pltpu.CompilerParams(
            dimension_semantics=("parallel",),  # shards across 2 TCs on v7x
        ),
        cost_estimate=pl.CostEstimate(
            flops=0,
            transcendentals=0,
            bytes_accessed=2 * total * itemsize,
        ),
    )(slab)

    return jnp.reshape(out_slab, out_shape)  # metadata-only


def pallas_reshape(x, *shape):
    """Equivalent of Reshape(*shape)(x):  x.view(shape)."""
    out_shape = _resolve_shape(x.size, shape)
    return _reshape_impl(x, out_shape)


class Reshape:
    """Mirror of the PyTorch module: Reshape(*args)(x) == x.view(args)."""

    def __init__(self, *args):
        self.shape = args

    def __call__(self, x):
        return pallas_reshape(x, *self.shape)


if __name__ == "__main__":
    key = jax.random.PRNGKey(0)
    # Small VAE-ish example: NCHW feature map flattened for an FC layer.
    x = jax.random.normal(key, (2, 4, 16, 16), dtype=jnp.float32)

    module = Reshape(-1, 4 * 16 * 16)  # (2, 4, 16, 16) -> (2, 1024)
    y = jax.block_until_ready(module(x))

    ref = jnp.reshape(x, (-1, 4 * 16 * 16))
    assert y.shape == (2, 1024), y.shape
    assert y.dtype == x.dtype
    assert bool(jnp.array_equal(y, ref))

    # Exercise the metadata-only fallback (total not a multiple of 128).
    x2 = jax.random.normal(key, (3, 5, 7), dtype=jnp.float32)
    y2 = jax.block_until_ready(Reshape(105)(x2))
    assert bool(jnp.array_equal(y2, jnp.reshape(x2, (105,))))

    print("KERNEL_OK")
</pallas_src>

<mosaic_0001>
module attributes {stable_mosaic.version = 11 : i64} {
  func.func @_copy_kernel(%arg0: i32, %arg1: memref<1x2048xf32, #tpu.memory_space<vmem>>, %arg2: memref<1x2048xf32, #tpu.memory_space<vmem>>) attributes {dimension_semantics = [#tpu.dimension_semantics<parallel>], iteration_bounds = array<i64: 1>, scalar_prefetch = 0 : i64, scratch_operands = 0 : i64, tpu.core_type = #tpu.core_type<tc>, window_params = [{transform_indices = @transform_0, window_bounds = array<i64: 1, 2048>}, {transform_indices = @transform_1, window_bounds = array<i64: 1, 2048>}]} {
    %c0 = arith.constant 0 : index
    %c0_0 = arith.constant 0 : index
    %0 = vector.load %arg1[%c0, %c0_0] : memref<1x2048xf32, #tpu.memory_space<vmem>>, vector<1x2048xf32>
    %c0_1 = arith.constant 0 : index
    %c0_2 = arith.constant 0 : index
    %1 = vector.load %arg2[%c0_1, %c0_2] : memref<1x2048xf32, #tpu.memory_space<vmem>>, vector<1x2048xf32>
    tpu.vector_store %arg2[%c0_1, %c0_2], %0 {strides = array<i32>} : memref<1x2048xf32, #tpu.memory_space<vmem>>, vector<1x2048xf32>,
    return
  }
  func.func @transform_0(%arg0: i32) -> (i32, i32) {
    %c0_i32 = arith.constant 0 : i32
    %c0_i32_0 = arith.constant 0 : i32
    return %arg0, %c0_i32 : i32, i32
  }
  func.func @transform_1(%arg0: i32) -> (i32, i32) {
    %c0_i32 = arith.constant 0 : i32
    %c0_i32_0 = arith.constant 0 : i32
    return %arg0, %c0_i32 : i32, i32
  }
}

</mosaic_0001>

<llo_original>
// kernel: _reshape_impl.1
$region0: #{_reshape_impl.1}
  #allocation0 [shape = 'u32[]', space=smem, size = 0x4, offset = 0x4, fixed_abs, tag = 'smem constant byte address 0x4 - core index']
  #allocation1 [shape = 'u32[144,128]{1,0:T(1,128)}', space=vmem, size = 0x12000, scoped, tag = 'internal scratch']
  %s0 = inlined_call_operand.vmem [shape: f32[1,2048], index: 0, kind: input, shape index: {}, may-alias: {0,1}]
  %s1 = inlined_call_operand.vmem [shape: f32[1,2048], index: 1, kind: output, shape index: {}, may-alias: {0,1}]
  %s2 = sld [smem:[#allocation0]]
  $region14: #{_reshape_impl.1} parent=0
    _
  %s4 = ssub.s32 1, %s2
  %s5 = scalar_select 0, %s4, %s2
  // Predicated region
  $region2: #{_reshape_impl.1} parent=0 // pred_check
    _
  $region3: #{_reshape_impl.1} parent=0 // pred_check_branch
    %7 = sbr.rel (0) target = $region5
  $region4: #{_reshape_impl.1} parent=0 // pred_region
    _
  $region5: #{_reshape_impl.1} parent=0 // pred_fallthru
    _
  %v8 = vld [vmem:[%s0] sm:$0xff]
  %v9 = vld [vmem:[%s0 + $0x8] sm:$0xff]
  %10 = vst [vmem:[%s1] sm:$0xff] %v8
  %11 = vst [vmem:[%s1 + $0x8] sm:$0xff] %v9
  // Predicated region
  $region6: #{_reshape_impl.1} parent=0 // pred_check
    _
  $region7: #{_reshape_impl.1} parent=0 // pred_check_branch
    %13 = sbr.rel (0) target = $region9
  $region8: #{_reshape_impl.1} parent=0 // pred_region
    _
  $region9: #{_reshape_impl.1} parent=0 // pred_fallthru
    _
  // Predicated region
  $region10: #{_reshape_impl.1} parent=0 // pred_check
    _
  $region11: #{_reshape_impl.1} parent=0 // pred_check_branch
    %15 = sbr.rel (0) target = $region13
  $region12: #{_reshape_impl.1} parent=0 // pred_region
    _
  $region13: #{_reshape_impl.1} parent=0 // pred_fallthru
    _

</llo_original>
